<compile_context>
chip_gen: v6e
topology: v6e:2x2x1
jax: 0.10.0
libtpu: 0.0.40
codegen_flags: <defaults>
</compile_context>

<pallas_src>
import jax
import jax.numpy as jnp
from jax.experimental import pallas as pl
from jax.experimental.pallas import tpu as pltpu


def hue_attention_kernel(w1_ref, b1_ref, w2_ref, b2_ref, x_ref, o_ref):
    # w1_ref: SMEM (mid*C,)   conv1 weight, row-major [m, c]
    # b1_ref: SMEM (mid,)     conv1 bias
    # w2_ref: SMEM (mid,)     conv2 weight
    # b2_ref: SMEM (1,)       conv2 bias
    # x_ref / o_ref: VMEM (1, C, TILE_S)
    x = x_ref[0].astype(jnp.float32)          # (C, TILE_S)
    C, S = x.shape
    mid = b1_ref.shape[0]

    # Attention logit accumulated on the VPU: mid*(C+1) FMAs per lane.
    a = jnp.full((1, S), b2_ref[0], dtype=jnp.float32)
    for m in range(mid):                      # static unroll (mid is tiny)
        h = jnp.full((1, S), b1_ref[m], dtype=jnp.float32)
        for c in range(C):                    # static unroll (C is tiny)
            h = h + w1_ref[m * C + c] * x[c:c + 1, :]
        h = jnp.maximum(h, 0.0)               # ReLU
        a = a + w2_ref[m] * h
    a = jax.nn.sigmoid(a)                     # (1, TILE_S)  -> EUP

    # Broadcast the single-channel attention over C and store lane-dense.
    o_ref[0] = (x * a).astype(o_ref.dtype)


def hue_attention(x_nchw, w1, b1, w2, b2, *, tile_s=8192):
    """x_nchw: (N, C, H, W); w1: (mid, C); b1: (mid,); w2: (1, mid); b2: (1,)."""
    N, C, H, W = x_nchw.shape
    mid = w1.shape[0]
    S = H * W

    # Lane-dense spatial tile: multiple of 128, capped at tile_s, never bigger
    # than needed for this image, and never so big that the (double-buffered)
    # input + output blocks blow the VMEM budget on any chip.
    itemsize = jnp.dtype(x_nchw.dtype).itemsize
    vmem_budget = 24 * 1024 * 1024            # for x + out blocks, 2x buffered
    max_tile_by_vmem = max(128, (vmem_budget // (4 * C * itemsize)) // 128 * 128)
    s128 = pl.cdiv(S, 128) * 128
    tile = min(tile_s, s128, max_tile_by_vmem)
    s_pad = pl.cdiv(S, tile) * tile

    x3d = x_nchw.reshape(N, C, S)             # free reshape, no transpose
    if s_pad != S:
        x3d = jnp.pad(x3d, ((0, 0), (0, 0), (0, s_pad - S)))

    # The handful of conv parameters live in SMEM (scalar reads, no VMEM DMA).
    w1_flat = w1.reshape(mid * C).astype(jnp.float32)
    b1_f = b1.reshape(mid).astype(jnp.float32)
    w2_flat = jnp.reshape(w2, (mid,)).astype(jnp.float32)
    b2_f = b2.reshape(1).astype(jnp.float32)

    smem = pl.BlockSpec(memory_space=pltpu.MemorySpace.SMEM)
    grid = (N, s_pad // tile)

    out3d = pl.pallas_call(
        hue_attention_kernel,
        out_shape=jax.ShapeDtypeStruct((N, C, s_pad), x3d.dtype),
        grid=grid,
        in_specs=[
            smem, smem, smem, smem,                               # w1, b1, w2, b2
            pl.BlockSpec((1, C, tile), lambda n, s: (n, 0, s)),   # x tile
        ],
        out_specs=pl.BlockSpec((1, C, tile), lambda n, s: (n, 0, s)),
        compiler_params=pltpu.CompilerParams(
            dimension_semantics=("parallel", "parallel"),
            vmem_limit_bytes=32 * 1024 * 1024,
        ),
    )(w1_flat, b1_f, w2_flat, b2_f, x3d)

    if s_pad != S:
        out3d = out3d[:, :, :S]
    return out3d.reshape(N, C, H, W)


def reference_jax(x_nchw, w1, b1, w2, b2):
    # pure-JAX reference of the PyTorch forward (1x1 convs as einsums)
    h = jnp.einsum("nchw,mc->nmhw", x_nchw, w1) + b1[None, :, None, None]
    h = jnp.maximum(h, 0.0)
    a = jnp.einsum("nmhw,om->nohw", h, w2) + b2[None, :, None, None]
    a = jax.nn.sigmoid(a)
    return x_nchw * a


if __name__ == "__main__":
    # small shapes: batch=2, channels=4, spatial=16 -> mid_channels = max(4//2,1) = 2
    N, C, H, W = 2, 4, 16, 16
    mid = max(C // 2, 1)

    key = jax.random.PRNGKey(0)
    kx, kw1, kb1, kw2, kb2 = jax.random.split(key, 5)

    x = jax.random.normal(kx, (N, C, H, W), dtype=jnp.float32)
    # deterministic synthetic parameters (conv 1x1 weights squeezed to 2-D)
    w1 = jax.random.normal(kw1, (mid, C), dtype=jnp.float32) * 0.5   # conv1.weight[...,0,0]
    b1 = jax.random.normal(kb1, (mid,), dtype=jnp.float32) * 0.1     # conv1.bias
    w2 = jax.random.normal(kw2, (1, mid), dtype=jnp.float32) * 0.5   # conv2.weight[...,0,0]
    b2 = jax.random.normal(kb2, (1,), dtype=jnp.float32) * 0.1       # conv2.bias

    out = hue_attention(x, w1, b1, w2, b2)
    out = jax.block_until_ready(out)

    ref = reference_jax(x, w1, b1, w2, b2)
    assert out.shape == (N, C, H, W)
    assert jnp.allclose(out, ref, atol=1e-5, rtol=1e-5), "mismatch vs reference"

    print("KERNEL_OK")
</pallas_src>

<mosaic_0001>
module attributes {stable_mosaic.version = 11 : i64} {
  func.func @hue_attention_kernel(%arg0: i32, %arg1: i32, %arg2: memref<8xf32, #tpu.memory_space<smem>>, %arg3: memref<2xf32, #tpu.memory_space<smem>>, %arg4: memref<2xf32, #tpu.memory_space<smem>>, %arg5: memref<1xf32, #tpu.memory_space<smem>>, %arg6: memref<1x4x256xf32, #tpu.memory_space<vmem>>, %arg7: memref<1x4x256xf32, #tpu.memory_space<vmem>>) attributes {dimension_semantics = [#tpu.dimension_semantics<parallel>, #tpu.dimension_semantics<parallel>], iteration_bounds = array<i64: 2, 1>, scalar_prefetch = 0 : i64, scratch_operands = 0 : i64, tpu.core_type = #tpu.core_type<tc>, window_params = [{transform_indices = @transform_0, window_bounds = array<i64: 8>}, {transform_indices = @transform_1, window_bounds = array<i64: 2>}, {transform_indices = @transform_2, window_bounds = array<i64: 2>}, {transform_indices = @transform_3, window_bounds = array<i64: 1>}, {transform_indices = @transform_4, window_bounds = array<i64: 1, 4, 256>}, {transform_indices = @transform_5, window_bounds = array<i64: 1, 4, 256>}]} {
    %c0 = arith.constant 0 : index
    %c0_0 = arith.constant 0 : index
    %c0_1 = arith.constant 0 : index
    %0 = vector.load %arg6[%c0, %c0_0, %c0_1] : memref<1x4x256xf32, #tpu.memory_space<vmem>>, vector<1x4x256xf32>
    %1 = vector.shape_cast %0 : vector<1x4x256xf32> to vector<4x256xf32>
    %c0_2 = arith.constant 0 : index
    %2 = memref.load %arg5[%c0_2] : memref<1xf32, #tpu.memory_space<smem>>
    %3 = vector.broadcast %2 : f32 to vector<1x256xf32>
    %c0_3 = arith.constant 0 : index
    %4 = memref.load %arg3[%c0_3] : memref<2xf32, #tpu.memory_space<smem>>
    %5 = vector.broadcast %4 : f32 to vector<1x256xf32>
    %c0_4 = arith.constant 0 : index
    %6 = memref.load %arg2[%c0_4] : memref<8xf32, #tpu.memory_space<smem>>
    %7 = vector.extract_strided_slice %1 {offsets = [0, 0], sizes = [1, 256], strides = [1, 1]} : vector<4x256xf32> to vector<1x256xf32>
    %8 = vector.broadcast %6 : f32 to vector<1x256xf32>
    %9 = arith.mulf %8, %7 : vector<1x256xf32>
    %10 = arith.addf %5, %9 : vector<1x256xf32>
    %c1 = arith.constant 1 : index
    %11 = memref.load %arg2[%c1] : memref<8xf32, #tpu.memory_space<smem>>
    %12 = vector.extract_strided_slice %1 {offsets = [1, 0], sizes = [1, 256], strides = [1, 1]} : vector<4x256xf32> to vector<1x256xf32>
    %13 = vector.broadcast %11 : f32 to vector<1x256xf32>
    %14 = arith.mulf %13, %12 : vector<1x256xf32>
    %15 = arith.addf %10, %14 : vector<1x256xf32>
    %c2 = arith.constant 2 : index
    %16 = memref.load %arg2[%c2] : memref<8xf32, #tpu.memory_space<smem>>
    %17 = vector.extract_strided_slice %1 {offsets = [2, 0], sizes = [1, 256], strides = [1, 1]} : vector<4x256xf32> to vector<1x256xf32>
    %18 = vector.broadcast %16 : f32 to vector<1x256xf32>
    %19 = arith.mulf %18, %17 : vector<1x256xf32>
    %20 = arith.addf %15, %19 : vector<1x256xf32>
    %c3 = arith.constant 3 : index
    %21 = memref.load %arg2[%c3] : memref<8xf32, #tpu.memory_space<smem>>
    %22 = vector.extract_strided_slice %1 {offsets = [3, 0], sizes = [1, 256], strides = [1, 1]} : vector<4x256xf32> to vector<1x256xf32>
    %23 = vector.broadcast %21 : f32 to vector<1x256xf32>
    %24 = arith.mulf %23, %22 : vector<1x256xf32>
    %25 = arith.addf %20, %24 : vector<1x256xf32>
    %cst = arith.constant 0.000000e+00 : f32
    %26 = vector.broadcast %cst : f32 to vector<1x256xf32>
    %27 = arith.maximumf %25, %26 : vector<1x256xf32>
    %c0_5 = arith.constant 0 : index
    %28 = memref.load %arg4[%c0_5] : memref<2xf32, #tpu.memory_space<smem>>
    %29 = vector.broadcast %28 : f32 to vector<1x256xf32>
    %30 = arith.mulf %29, %27 : vector<1x256xf32>
    %31 = arith.addf %3, %30 : vector<1x256xf32>
    %c1_6 = arith.constant 1 : index
    %32 = memref.load %arg3[%c1_6] : memref<2xf32, #tpu.memory_space<smem>>
    %33 = vector.broadcast %32 : f32 to vector<1x256xf32>
    %c4 = arith.constant 4 : index
    %34 = memref.load %arg2[%c4] : memref<8xf32, #tpu.memory_space<smem>>
    %35 = vector.extract_strided_slice %1 {offsets = [0, 0], sizes = [1, 256], strides = [1, 1]} : vector<4x256xf32> to vector<1x256xf32>
    %36 = vector.broadcast %34 : f32 to vector<1x256xf32>
    %37 = arith.mulf %36, %35 : vector<1x256xf32>
    %38 = arith.addf %33, %37 : vector<1x256xf32>
    %c5 = arith.constant 5 : index
    %39 = memref.load %arg2[%c5] : memref<8xf32, #tpu.memory_space<smem>>
    %40 = vector.extract_strided_slice %1 {offsets = [1, 0], sizes = [1, 256], strides = [1, 1]} : vector<4x256xf32> to vector<1x256xf32>
    %41 = vector.broadcast %39 : f32 to vector<1x256xf32>
    %42 = arith.mulf %41, %40 : vector<1x256xf32>
    %43 = arith.addf %38, %42 : vector<1x256xf32>
    %c6 = arith.constant 6 : index
    %44 = memref.load %arg2[%c6] : memref<8xf32, #tpu.memory_space<smem>>
    %45 = vector.extract_strided_slice %1 {offsets = [2, 0], sizes = [1, 256], strides = [1, 1]} : vector<4x256xf32> to vector<1x256xf32>
    %46 = vector.broadcast %44 : f32 to vector<1x256xf32>
    %47 = arith.mulf %46, %45 : vector<1x256xf32>
    %48 = arith.addf %43, %47 : vector<1x256xf32>
    %c7 = arith.constant 7 : index
    %49 = memref.load %arg2[%c7] : memref<8xf32, #tpu.memory_space<smem>>
    %50 = vector.extract_strided_slice %1 {offsets = [3, 0], sizes = [1, 256], strides = [1, 1]} : vector<4x256xf32> to vector<1x256xf32>
    %51 = vector.broadcast %49 : f32 to vector<1x256xf32>
    %52 = arith.mulf %51, %50 : vector<1x256xf32>
    %53 = arith.addf %48, %52 : vector<1x256xf32>
    %cst_7 = arith.constant 0.000000e+00 : f32
    %54 = vector.broadcast %cst_7 : f32 to vector<1x256xf32>
    %55 = arith.maximumf %53, %54 : vector<1x256xf32>
    %c1_8 = arith.constant 1 : index
    %56 = memref.load %arg4[%c1_8] : memref<2xf32, #tpu.memory_space<smem>>
    %57 = vector.broadcast %56 : f32 to vector<1x256xf32>
    %58 = arith.mulf %57, %55 : vector<1x256xf32>
    %59 = arith.addf %31, %58 : vector<1x256xf32>
    %60 = arith.negf %59 : vector<1x256xf32>
    %61 = math.exp %60 : vector<1x256xf32>
    %cst_9 = arith.constant 1.000000e+00 : f32
    %62 = vector.broadcast %cst_9 : f32 to vector<1x256xf32>
    %63 = arith.addf %62, %61 : vector<1x256xf32>
    %64 = arith.divf %62, %63 : vector<1x256xf32>
    %65 = vector.broadcast %64 : vector<1x256xf32> to vector<4x256xf32>
    %66 = arith.mulf %1, %65 : vector<4x256xf32>
    %c0_10 = arith.constant 0 : index
    %c0_11 = arith.constant 0 : index
    %c0_12 = arith.constant 0 : index
    %67 = vector.load %arg7[%c0_10, %c0_11, %c0_12] : memref<1x4x256xf32, #tpu.memory_space<vmem>>, vector<1x4x256xf32>
    %68 = vector.shape_cast %67 : vector<1x4x256xf32> to vector<4x256xf32>
    %69 = vector.shape_cast %66 : vector<4x256xf32> to vector<1x4x256xf32>
    tpu.vector_store %arg7[%c0_10, %c0_11, %c0_12], %69 {strides = array<i32>} : memref<1x4x256xf32, #tpu.memory_space<vmem>>, vector<1x4x256xf32>,
    return
  }
  func.func @transform_0(%arg0: i32, %arg1: i32) -> i32 {
    %c0_i32 = arith.constant 0 : i32
    %c0_i32_0 = arith.constant 0 : i32
    return %c0_i32 : i32
  }
  func.func @transform_1(%arg0: i32, %arg1: i32) -> i32 {
    %c0_i32 = arith.constant 0 : i32
    %c0_i32_0 = arith.constant 0 : i32
    return %c0_i32 : i32
  }
  func.func @transform_2(%arg0: i32, %arg1: i32) -> i32 {
    %c0_i32 = arith.constant 0 : i32
    %c0_i32_0 = arith.constant 0 : i32
    return %c0_i32 : i32
  }
  func.func @transform_3(%arg0: i32, %arg1: i32) -> i32 {
    %c0_i32 = arith.constant 0 : i32
    %c0_i32_0 = arith.constant 0 : i32
    return %c0_i32 : i32
  }
  func.func @transform_4(%arg0: i32, %arg1: i32) -> (i32, i32, i32) {
    %c0_i32 = arith.constant 0 : i32
    %c0_i32_0 = arith.constant 0 : i32
    return %arg0, %c0_i32, %arg1 : i32, i32, i32
  }
  func.func @transform_5(%arg0: i32, %arg1: i32) -> (i32, i32, i32) {
    %c0_i32 = arith.constant 0 : i32
    %c0_i32_0 = arith.constant 0 : i32
    return %arg0, %c0_i32, %arg1 : i32, i32, i32
  }
}

</mosaic_0001>

<llo_original>
// kernel: tpu_custom_call.1
$region0: #{tpu_custom_call.1}
  #allocation0 [shape = 'u32[]', space=smem, size = 0x4, offset = 0x4, fixed_abs, tag = 'smem constant byte address 0x4 - core index']
  #allocation1 [shape = 'u32[144,128]{1,0:T(1,128)}', space=vmem, size = 0x12000, scoped, tag = 'internal scratch']
  #allocation2 [shape = 'f32[1]{0:T(128)S(6)}', space=smem, size = 0x200, scoped, tag = 'scoped memory for tpu_custom_call.1']
  %s0 = inlined_call_operand.vmem [shape: f32[8], index: 0, kind: input, shape index: {}]
  %s1 = inlined_call_operand.vmem [shape: f32[2], index: 1, kind: input, shape index: {}]
  %s2 = inlined_call_operand.vmem [shape: f32[2], index: 2, kind: input, shape index: {}]
  %s3 = inlined_call_operand.<no memory space> [shape: f32[1], index: 3, kind: input, shape index: {}]
  %s4 = inlined_call_operand.hbm [shape: f32[2,4,256], index: 4, kind: input, shape index: {}]
  %s5 = inlined_call_operand.hbm [shape: f32[2,4,256], index: 5, kind: output, shape index: {}]
  %s6 = sld [smem:[#allocation0]]
  $region69: #{tpu_custom_call.1} parent=0
    _
  %s8 = ssub.s32 1, %s6
  %s9 = scalar_select 0, %s8, %s6
  %10 = sst [smem:[#allocation2]] %s3
  $region1: #{tpu_custom_call.1} parent=0
    #allocation3 [shape = 'u8[512]{0}', space=smem, size = 0x200, scoped, tag = 'input window, operand 0, single buffered']
    #allocation4 [shape = 's32[2]{0}', space=sflag, size = 0x8, scoped, tag = 'scoped memory for tpu_custom_call.1']
    #allocation5 [shape = 's32[2]{0}', space=sflag, size = 0x8, scoped, tag = 'scoped memory for tpu_custom_call.1']
    #allocation6 [shape = 's32[2]{0}', space=sflag, size = 0x8, scoped, tag = 'scoped memory for tpu_custom_call.1']
    #allocation7 [shape = 'u8[512]{0}', space=smem, size = 0x200, scoped, tag = 'input window, operand 1, single buffered']
    #allocation8 [shape = 's32[1]{0}', space=sflag, size = 0x4, scoped, tag = 'scoped memory for tpu_custom_call.1']
    #allocation9 [shape = 'u8[512]{0}', space=smem, size = 0x200, scoped, tag = 'input window, operand 2, single buffered']
    #allocation10 [shape = 'u8[8192]{0}', space=vmem, size = 0x2000, scoped, tag = 'input window, operand 4']
    #allocation11 [shape = 'u8[8192]{0}', space=vmem, size = 0x2000, scoped, tag = 'output window, operand 0']
    %11 = vsyncpa [#allocation6], 0
    %12 = vsyncpa [#allocation8], 0
    %13 = vsyncpa [#allocation4], 0
    %s14 = scalar_lea.sflag [#allocation4], 1
    %15 = vsyncpa %s14, 0
    %16 = vsyncpa [#allocation5], 0
    %s17 = scalar_lea.sflag [#allocation5], 1
    %18 = vsyncpa %s17, 0
    loop: start=0, step=1, limit=4
    $region2: #{tpu_custom_call.1} parent=1 // loop_pre_header
      _
    $region3: #{tpu_custom_call.1} parent=1 // loop_header
      %s20 = sphi 0, %s24
      %p21 = scmp.ge.s32.totalorder %s20, 4
      %s27 = sphi 0, %s39
      %s28 = sphi 0, %s35
      %s29 = sphi 0, %s27
      %s30 = sphi 0, %s28
      %s31 = sphi 0, %s29
      %s32 = sphi 0, %s30
      %s40 = sphi 0, %s40
      %s42 = sphi 0, %s40
      %s43 = sphi 0, %s42
      %s57 = sphi 0, %s43
      %s61 = sphi 0, %s61
      %s63 = sphi 0, %s61
      %s64 = sphi 0, %s63
      %s78 = sphi 0, %s64
      %s82 = sphi 0, %s82
      %s84 = sphi 0, %s82
      %s85 = sphi 0, %s84
      %s99 = sphi 0, %s85
      %s103 = sphi 0, %s103
      %s105 = sphi 0, %s103
      %s106 = sphi 0, %s105
      %s120 = sphi 0, %s106
      %s128 = sphi 0, %s130
      %s131 = sphi 0, %s128
      %s132 = sphi 0, %s131
      %s148 = sphi 0, %s132
      %s156 = sphi 0, %s158
      %s159 = sphi 0, %s156
      %s160 = sphi 0, %s159
      %s176 = sphi 0, %s160
    $region4: #{tpu_custom_call.1} parent=1 // loop_header_branch
      %23 = sbr.rel (%p21) target = $region8
    $region5: #{tpu_custom_call.1} parent=1 // loop_body
      %s25 = ssub.s32 %s20, 1
      %s26 = ssub.s32 %s20, 2
      %s33 = sadd.s32 1, %s28
      %p34 = scmp.ge.s32.totalorder %s33, 1
      %s35 = scalar_select %p34, 0, %s33
      %s36 = sadd.s32 1, %s27
      %s37 = scalar_select %p34, %s36, %s27
      %p38 = scmp.ge.s32.totalorder %s37, 2
      %s39 = scalar_select %p38, 0, %s37
      %s41 = sadd.s32 %s40, 1
      %p44 = scmp.eq.s32.totalorder %s20, 1
      %p45 = scmp.ne.s32.totalorder %s40, %s42
      %p46 = scmp.eq.s32.totalorder %s20, 0
      %p47 = por %p45, %p46
      %p48 = scmp.ne.s32.totalorder %s40, %s42
      %p49 = scmp.eq.s32.totalorder %s25, 1
      %p50 = por %p48, %p49
      %p51 = scmp.ne.s32.totalorder %s42, %s43
      %p52 = scmp.eq.s32.totalorder %s25, 0
      %p53 = por %p51, %p52
      %p54 = scmp.ne.s32.totalorder %s42, %s43
      %p55 = scmp.eq.s32.totalorder %s26, 1
      %p56 = por %p54, %p55
      %p58 = scmp.ne.s32.totalorder %s43, %s57
      %p59 = scmp.eq.s32.totalorder %s26, 0
      %p60 = por %p58, %p59
      %s62 = sadd.s32 %s61, 1
      %p65 = scmp.eq.s32.totalorder %s20, 1
      %p66 = scmp.ne.s32.totalorder %s61, %s63
      %p67 = scmp.eq.s32.totalorder %s20, 0
      %p68 = por %p66, %p67
      %p69 = scmp.ne.s32.totalorder %s61, %s63
      %p70 = scmp.eq.s32.totalorder %s25, 1
      %p71 = por %p69, %p70
      %p72 = scmp.ne.s32.totalorder %s63, %s64
      %p73 = scmp.eq.s32.totalorder %s25, 0
      %p74 = por %p72, %p73
      %p75 = scmp.ne.s32.totalorder %s63, %s64
      %p76 = scmp.eq.s32.totalorder %s26, 1
      %p77 = por %p75, %p76
      %p79 = scmp.ne.s32.totalorder %s64, %s78
      %p80 = scmp.eq.s32.totalorder %s26, 0
      %p81 = por %p79, %p80
      %s83 = sadd.s32 %s82, 1
      %p86 = scmp.eq.s32.totalorder %s20, 1
      %p87 = scmp.ne.s32.totalorder %s82, %s84
      %p88 = scmp.eq.s32.totalorder %s20, 0
      %p89 = por %p87, %p88
      %p90 = scmp.ne.s32.totalorder %s82, %s84
      %p91 = scmp.eq.s32.totalorder %s25, 1
      %p92 = por %p90, %p91
      %p93 = scmp.ne.s32.totalorder %s84, %s85
      %p94 = scmp.eq.s32.totalorder %s25, 0
      %p95 = por %p93, %p94
      %p96 = scmp.ne.s32.totalorder %s84, %s85
      %p97 = scmp.eq.s32.totalorder %s26, 1
      %p98 = por %p96, %p97
      %p100 = scmp.ne.s32.totalorder %s85, %s99
      %p101 = scmp.eq.s32.totalorder %s26, 0
      %p102 = por %p100, %p101
      %s104 = sadd.s32 %s103, 1
      %p107 = scmp.eq.s32.totalorder %s20, 1
      %p108 = scmp.ne.s32.totalorder %s103, %s105
      %p109 = scmp.eq.s32.totalorder %s20, 0
      %p110 = por %p108, %p109
      %p111 = scmp.ne.s32.totalorder %s103, %s105
      %p112 = scmp.eq.s32.totalorder %s25, 1
      %p113 = por %p111, %p112
      %p114 = scmp.ne.s32.totalorder %s105, %s106
      %p115 = scmp.eq.s32.totalorder %s25, 0
      %p116 = por %p114, %p115
      %p117 = scmp.ne.s32.totalorder %s105, %s106
      %p118 = scmp.eq.s32.totalorder %s26, 1
      %p119 = por %p117, %p118
      %p121 = scmp.ne.s32.totalorder %s106, %s120
      %p122 = scmp.eq.s32.totalorder %s26, 0
      %p123 = por %p121, %p122
      %s124 = ssub.s32 %s27, %s39
      %s125 = ssub.s32 %s28, %s35
      %s126 = sor.u32 %s124, %s125
      %p127 = scmp.eq.s32.totalorder %s126, 0
      %s129 = sadd.s32 %s128, 1
      %s130 = scalar_select %p127, %s128, %s129
      %p133 = pneg %p127
      %p134 = scmp.eq.s32.totalorder %s20, 1
      %p135 = por %p133, %p134
      %p136 = scmp.ne.s32.totalorder %s128, %s131
      %p137 = scmp.eq.s32.totalorder %s20, 0
      %p138 = por %p136, %p137
      %p139 = scmp.ne.s32.totalorder %s128, %s131
      %p140 = scmp.eq.s32.totalorder %s25, 1
      %p141 = por %p139, %p140
      %p142 = scmp.ne.s32.totalorder %s131, %s132
      %p143 = scmp.eq.s32.totalorder %s25, 0
      %p144 = por %p142, %p143
      %p145 = scmp.ne.s32.totalorder %s131, %s132
      %p146 = scmp.eq.s32.totalorder %s26, 1
      %p147 = por %p145, %p146
      %p149 = scmp.ne.s32.totalorder %s132, %s148
      %p150 = scmp.eq.s32.totalorder %s26, 0
      %p151 = por %p149, %p150
      %s152 = ssub.s32 %s27, %s39
      %s153 = ssub.s32 %s28, %s35
      %s154 = sor.u32 %s152, %s153
      %p155 = scmp.eq.s32.totalorder %s154, 0
      %s157 = sadd.s32 %s156, 1
      %s158 = scalar_select %p155, %s156, %s157
      %p161 = pneg %p155
      %p162 = scmp.eq.s32.totalorder %s20, 1
      %p163 = por %p161, %p162
      %p164 = scmp.ne.s32.totalorder %s156, %s159
      %p165 = scmp.eq.s32.totalorder %s20, 0
      %p166 = por %p164, %p165
      %p167 = scmp.ne.s32.totalorder %s156, %s159
      %p168 = scmp.eq.s32.totalorder %s25, 1
      %p169 = por %p167, %p168
      %p170 = scmp.ne.s32.totalorder %s159, %s160
      %p171 = scmp.eq.s32.totalorder %s25, 0
      %p172 = por %p170, %p171
      %p173 = scmp.ne.s32.totalorder %s159, %s160
      %p174 = scmp.eq.s32.totalorder %s26, 1
      %p175 = por %p173, %p174
      %p177 = scmp.ne.s32.totalorder %s160, %s176
      %p178 = scmp.eq.s32.totalorder %s26, 0
      %p179 = por %p177, %p178
      %p180 = scmp.le.s32.totalorder 1, %s20
      %p181 = scmp.lt.s32.totalorder %s20, 3
      %p182 = pnand %p180, %p181
      %p183 = pneg %p182
      // Predicated region
      $region9: #{tpu_custom_call.1} parent=5 // pred_check
        _
      $region10: #{tpu_custom_call.1} parent=5 // pred_check_branch
        %185 = sbr.rel (%p182) target = $region12
      $region11: #{tpu_custom_call.1} parent=5 // pred_region
        %s186 = ssub.s32 %s20, 1
        // Predicated region
        $region13: #{tpu_custom_call.1} parent=11 // pred_check
          %p187 = pneg %p53
        $region14: #{tpu_custom_call.1} parent=11 // pred_check_branch
          %189 = sbr.rel (%p187) target = $region16
        $region15: #{tpu_custom_call.1} parent=11 // pred_region
          %s191 = ssub.s32 16, 16
          %192 = vsyncadd [#allocation6], %s191
          %s194 = sshll.u32 %s0, 4
          %s195 = int_to_ptr.vmem [resolvable:$true] %s194
          %197 = dma.vmem_to_smem %s195, 16, [#allocation3], [#allocation6]
        $region16: #{tpu_custom_call.1} parent=11 // pred_fallthru
          _
        // Predicated region
        $region17: #{tpu_custom_call.1} parent=11 // pred_check
          %p198 = pneg %p74
        $region18: #{tpu_custom_call.1} parent=11 // pred_check_branch
          %200 = sbr.rel (%p198) target = $region20
        $region19: #{tpu_custom_call.1} parent=11 // pred_region
          %s202 = ssub.s32 16, 16
          %203 = vsyncadd [#allocation8], %s202
          %s205 = sshll.u32 %s1, 4
          %s206 = int_to_ptr.vmem [resolvable:$true] %s205
          %208 = dma.vmem_to_smem %s206, 16, [#allocation7], [#allocation8]
        $region20: #{tpu_custom_call.1} parent=11 // pred_fallthru
          _
        // Predicated region
        $region21: #{tpu_custom_call.1} parent=11 // pred_check
          %p209 = pneg %p95
        $region22: #{tpu_custom_call.1} parent=11 // pred_check_branch
          %211 = sbr.rel (%p209) target = $region24
        $region23: #{tpu_custom_call.1} parent=11 // pred_region
          %s213 = ssub.s32 16, 16
          %214 = vsyncadd [#allocation8], %s213
          %s216 = sshll.u32 %s2, 4
          %s217 = int_to_ptr.vmem [resolvable:$true] %s216
          %219 = dma.vmem_to_smem %s217, 16, [#allocation9], [#allocation8]
        $region24: #{tpu_custom_call.1} parent=11 // pred_fallthru
          _
        // Predicated region
        $region25: #{tpu_custom_call.1} parent=11 // pred_check
          %p220 = pneg %p116
        $region26: #{tpu_custom_call.1} parent=11 // pred_check_branch
          %222 = sbr.rel (%p220) target = $region28
        $region27: #{tpu_custom_call.1} parent=11 // pred_region
          _
        $region28: #{tpu_custom_call.1} parent=11 // pred_fallthru
          _
      $region12: #{tpu_custom_call.1} parent=5 // pred_fallthru
        _
      %p223 = scmp.lt.s32.totalorder %s20, 2
      // Predicated region
      $region29: #{tpu_custom_call.1} parent=5 // pred_check
        %p224 = pneg %p223
      $region30: #{tpu_custom_call.1} parent=5 // pred_check_branch
        %226 = sbr.rel (%p224) target = $region32
      $region31: #{tpu_custom_call.1} parent=5 // pred_region
        // Predicated region
        $region33: #{tpu_custom_call.1} parent=31 // pred_check
          %p227 = pneg %p138
        $region34: #{tpu_custom_call.1} parent=31 // pred_check_branch
          %229 = sbr.rel (%p227) target = $region36
        $region35: #{tpu_custom_call.1} parent=31 // pred_region
          %s230 = sand.u32 %s128, 1
          %s231 = scalar_lea.sflag [#allocation4], %s230
          %s232 = sand.u32 %s128, 1
          %s233 = smul.addr %s232, 8
          %s234 = scalar_lea.vmem [#allocation10], %s233
          %s235 = smul.u32 2, %s28
          %s237 = ssub.s32 128, 128
          %238 = vsyncadd %s231, %s237
          %s239 = smul.addr %s27, 2
          %s240 = sadd.s32 %s235, %s239
          %s241 = smul.addr %s240, 64
          %s242 = scalar_lea.hbm %s4, %s241
          %s244 = sshll.u32 %s234, 4
          %s245 = int_to_ptr.vmem [resolvable:$true] %s244
          %247 = dma.hbm_to_vmem [thread:$0]  %s242, 128, %s245, %s231
        $region36: #{tpu_custom_call.1} parent=31 // pred_fallthru
          _
      $region32: #{tpu_custom_call.1} parent=5 // pred_fallthru
        _
      %p248 = scmp.le.s32.totalorder 1, %s20
      %p249 = scmp.lt.s32.totalorder %s20, 3
      %p250 = pnand %p248, %p249
      %p251 = pneg %p250
      // Predicated region
      $region37: #{tpu_custom_call.1} parent=5 // pred_check
        _
      $region38: #{tpu_custom_call.1} parent=5 // pred_check_branch
        %253 = sbr.rel (%p250) target = $region40
      $region39: #{tpu_custom_call.1} parent=5 // pred_region
        %s254 = ssub.s32 %s20, 1
        // Predicated region
        $region41: #{tpu_custom_call.1} parent=39 // pred_check
          %p255 = pneg %p53
        $region42: #{tpu_custom_call.1} parent=39 // pred_check_branch
          %257 = sbr.rel (%p255) target = $region44
        $region43: #{tpu_custom_call.1} parent=39 // pred_region
          %258 = dma.done [#allocation6], 16
        $region44: #{tpu_custom_call.1} parent=39 // pred_fallthru
          _
        // Predicated region
        $region45: #{tpu_custom_call.1} parent=39 // pred_check
          %p259 = pneg %p74
        $region46: #{tpu_custom_call.1} parent=39 // pred_check_branch
          %261 = sbr.rel (%p259) target = $region48
        $region47: #{tpu_custom_call.1} parent=39 // pred_region
          %262 = dma.done [#allocation8], 16
        $region48: #{tpu_custom_call.1} parent=39 // pred_fallthru
          _
        // Predicated region
        $region49: #{tpu_custom_call.1} parent=39 // pred_check
          %p263 = pneg %p95
        $region50: #{tpu_custom_call.1} parent=39 // pred_check_branch
          %265 = sbr.rel (%p263) target = $region52
        $region51: #{tpu_custom_call.1} parent=39 // pred_region
          %266 = dma.done [#allocation8], 16
        $region52: #{tpu_custom_call.1} parent=39 // pred_fallthru
          _
        %s267 = sand.u32 %s131, 1
        %s268 = scalar_lea.sflag [#allocation4], %s267
        %s269 = sand.u32 %s131, 1
        %s270 = smul.addr %s269, 8
        %s271 = scalar_lea.vmem [#allocation10], %s270
        // Predicated region
        $region53: #{tpu_custom_call.1} parent=39 // pred_check
          %p272 = pneg %p144
        $region54: #{tpu_custom_call.1} parent=39 // pred_check_branch
          %274 = sbr.rel (%p272) target = $region56
        $region55: #{tpu_custom_call.1} parent=39 // pred_region
          %275 = dma.done %s268, 128
        $region56: #{tpu_custom_call.1} parent=39 // pred_fallthru
          _
        %276 = sfence
        %p277 = pneg %p53
        %p278 = pneg %p50
        %p279 = pneg %p74
        %p280 = pneg %p71
        %p281 = pneg %p95
        %p282 = pneg %p92
        %p283 = pneg %p116
        %p284 = pneg %p113
        %s285 = sand.u32 %s131, 1
        %s286 = scalar_lea.sflag [#allocation4], %s285
        %s287 = sand.u32 %s131, 1
        %s288 = smul.addr %s287, 8
        %s289 = scalar_lea.vmem [#allocation10], %s288
        %p290 = pneg %p144
        %p291 = pneg %p141
        %p292 = pneg %p172
        %p293 = pneg %p169
        %s294 = sand.u32 %s159, 1
        %s295 = scalar_lea.sflag [#allocation5], %s294
        %s296 = sand.u32 %s159, 1
        %s297 = smul.addr %s296, 8
        %s298 = scalar_lea.vmem [#allocation11], %s297
        %s299 = smul.u32 2, %s30
        %s300 = smul.u32 2, %s30
        %v301 = vld [vmem:[%s271] sm:$0xff]
        %s302 = sld [smem:[#allocation2]]
        %v303 = vstv %s302
        %s304 = sld [smem:[#allocation7]]
        %v305 = vstv %s304
        %s306 = sld [smem:[#allocation3]]
        %v307 = vstv %s306
        %v308 = vmul.f32 %v307, %v301
        %v309 = vadd.f32 %v305, %v308
        %s310 = sld [smem:[#allocation3 + $0x1]]
        %v311 = vstv %s310
        %v312 = vmul.f32 %v311, %v301
        %v314 = vrot.slane %v312, 5
        %v315 = vrot.slane %v314, 4
        %v317 = vadd.f32 %v309, %v315
        %s318 = sld [smem:[#allocation3 + $0x2]]
        %v319 = vstv %s318
        %v320 = vmul.f32 %v319, %v301
        %v322 = vrot.slane %v320, 6
        %v323 = vrot.slane %v322, 4
        %v325 = vadd.f32 %v317, %v323
        %s326 = sld [smem:[#allocation3 + $0x3]]
        %v327 = vstv %s326
        %v328 = vmul.f32 %v327, %v301
        %v330 = vrot.slane %v328, 7
        %v331 = vrot.slane %v330, 4
        %v333 = vadd.f32 %v325, %v331
        %v334 = vmax.f32 %v333, 0.0
        %s335 = sld [smem:[#allocation9]]
        %v336 = vstv %s335
        %v337 = vmul.f32 %v336, %v334
        %v338 = vadd.f32 %v303, %v337
        %s339 = sld [smem:[#allocation7 + $0x1]]
        %v340 = vstv %s339
        %s341 = sld [smem:[#allocation3 + $0x4]]
        %v342 = vstv %s341
        %v343 = vmul.f32 %v342, %v301
        %v344 = vadd.f32 %v340, %v343
        %s345 = sld [smem:[#allocation3 + $0x5]]
        %v346 = vstv %s345
        %v347 = vmul.f32 %v346, %v301
        %v349 = vrot.slane %v347, 5
        %v350 = vrot.slane %v349, 4
        %v352 = vadd.f32 %v344, %v350
        %s353 = sld [smem:[#allocation3 + $0x6]]
        %v354 = vstv %s353
        %v355 = vmul.f32 %v354, %v301
        %v357 = vrot.slane %v355, 6
        %v358 = vrot.slane %v357, 4
        %v360 = vadd.f32 %v352, %v358
        %s361 = sld [smem:[#allocation3 + $0x7]]
        %v362 = vstv %s361
        %v363 = vmul.f32 %v362, %v301
        %v365 = vrot.slane %v363, 7
        %v366 = vrot.slane %v365, 4
        %v368 = vadd.f32 %v360, %v366
        %v369 = vmax.f32 %v368, 0.0
        %s370 = sld [smem:[#allocation9 + $0x1]]
        %v371 = vstv %s370
        %v372 = vmul.f32 %v371, %v369
        %v373 = vadd.f32 %v338, %v372
        %v374 = vxor.u32 %v373, 2147483648
        %v375 = vmul.f32 %v374, 1.442695
        %v376 = vpow.pop %v375
        %v377 = vadd.f32 %v376, 1.0
        %v378 = vrcp.pop %v377
        %v379 = vmul.f32 1.0, %v378
        %v381 = vlaneseq
        %v382 = vshrl.u32 %v381, 7
        %v383 = vsub.s32 0, %v382
        %v384 = vrot.slane %v379, %v383
        %v385 = vlaneseq
        %v386 = vshrl.u32 %v385, 7
        %v387 = vsub.s32 4, %v386
        %v388 = vrot.slane %v379, %v387
        %v391 = vlaneseq
        %v392 = vshrl.u32 %v391, 7
        %v393 = vsub.s32 0, %v392
        %v394 = vrot.slane %v384, %v393
        %v395 = vlaneseq
        %v396 = vshrl.u32 %v395, 7
        %v397 = vsub.s32 0, %v396
        %v398 = vrot.slane %v388, %v397
        %v401 = vcombine.low %v394, %v398
        %v403 = vmul.f32 %v301, %v401
        %404 = vst [vmem:[%s298] sm:$0xff] %v403
        %s405 = sand.u32 %s159, 1
        %s406 = scalar_lea.sflag [#allocation5], %s405
        %s407 = sand.u32 %s159, 1
        %s408 = smul.addr %s407, 8
        %s409 = scalar_lea.vmem [#allocation11], %s408
        // Predicated region
        $region57: #{tpu_custom_call.1} parent=39 // pred_check
          %p410 = pneg %p169
        $region58: #{tpu_custom_call.1} parent=39 // pred_check_branch
          %412 = sbr.rel (%p410) target = $region60
        $region59: #{tpu_custom_call.1} parent=39 // pred_region
          %s413 = smul.u32 2, %s30
          %s415 = ssub.s32 128, 128
          %416 = vsyncadd %s406, %s415
          %s417 = smul.addr %s29, 2
          %s418 = sadd.s32 %s413, %s417
          %s419 = smul.addr %s418, 64
          %s420 = scalar_lea.hbm %s5, %s419
          %s422 = sshll.u32 %s409, 4
          %s423 = int_to_ptr.vmem [resolvable:$true] %s422
          %425 = dma.vmem_to_hbm [thread:$0]  %s423, 128, %s420, %s406
        $region60: #{tpu_custom_call.1} parent=39 // pred_fallthru
          _
      $region40: #{tpu_custom_call.1} parent=5 // pred_fallthru
        _
      %p426 = scmp.le.s32.totalorder 2, %s20
      // Predicated region
      $region61: #{tpu_custom_call.1} parent=5 // pred_check
        %p427 = pneg %p426
      $region62: #{tpu_custom_call.1} parent=5 // pred_check_branch
        %429 = sbr.rel (%p427) target = $region64
      $region63: #{tpu_custom_call.1} parent=5 // pred_region
        %s430 = ssub.s32 %s20, 2
        // Predicated region
        $region65: #{tpu_custom_call.1} parent=63 // pred_check
          %p431 = pneg %p175
        $region66: #{tpu_custom_call.1} parent=63 // pred_check_branch
          %433 = sbr.rel (%p431) target = $region68
        $region67: #{tpu_custom_call.1} parent=63 // pred_region
          %s434 = sand.u32 %s160, 1
          %s435 = scalar_lea.sflag [#allocation5], %s434
          %s436 = sand.u32 %s160, 1
          %s437 = smul.addr %s436, 8
          %s438 = scalar_lea.vmem [#allocation11], %s437
          %439 = dma.done %s435, 128
        $region68: #{tpu_custom_call.1} parent=63 // pred_fallthru
          _
      $region64: #{tpu_custom_call.1} parent=5 // pred_fallthru
        _
    $region6: #{tpu_custom_call.1} parent=1 // loop_footer
      %s24 = sadd.s32 1, %s20
    $region7: #{tpu_custom_call.1} parent=1 // loop_footer_branch
      %19 = sbr.rel target = $region3
    $region8: #{tpu_custom_call.1} parent=1 // loop_exit
      _
    %440 = vsyncpa [#allocation4], 1
    %s441 = scalar_lea.sflag [#allocation4], 1
    %442 = vsyncpa %s441, 1
    %443 = vsyncpa [#allocation5], 1
    %s444 = scalar_lea.sflag [#allocation5], 1
    %445 = vsyncpa %s444, 1
    %446 = vsyncpa [#allocation6], 1
    %s447 = scalar_lea.sflag [#allocation6], 1
    %448 = vsyncpa %s447, 1
    %449 = vsyncpa [#allocation8], 1

</llo_original>
